<compile_context>
chip_gen: v7x
topology: tpu7x:2x2x1
jax: 0.10.0
libtpu: 0.0.40
codegen_flags: <defaults>
</compile_context>

<pallas_src>
import jax
import jax.numpy as jnp
import numpy as np
from jax import lax
from jax.experimental import pallas as pl
from jax.experimental.pallas import tpu as pltpu


def attn_general_kernel(hidden_ref, outputs_ref, w_ref, b_ref, out_ref):
    """Attention energies + softmax for one batch tile.

    hidden_ref : (B_TILE, N)     f32  decoder states for this tile
    outputs_ref: (T, B_TILE, N)  f32  encoder outputs, native layout (N on lanes)
    w_ref      : (N, N)          f32  nn.Linear weight, layout (out, in)
    b_ref      : (1, N)          f32  nn.Linear bias
    out_ref    : (B_TILE, T)     f32  softmax over T (lane-dense store)
    """
    hidden = hidden_ref[...]                                   # (B_TILE, N)
    w = w_ref[...]                                             # (N, N)
    bias = b_ref[...]                                          # (1, N)

    # energy[b, t] = hidden[b] . (W @ outs[t, b] + bias)
    #             = sum_n (hidden @ W)[b, n] * outs[t, b, n] + hidden[b] . bias
    hW = jnp.dot(hidden, w, preferred_element_type=jnp.float32)   # (B_TILE, N), MXU
    hb = jnp.sum(hidden * bias, axis=-1, keepdims=True)           # (B_TILE, 1)

    # Per-row MXU contraction over N (B_TILE is small & static -> unrolled).
    # Each dot is the standard q @ k.T pattern (contract last dims of both).
    b_tile = hidden_ref.shape[0]
    rows = []
    for b in range(b_tile):
        outs_b = outputs_ref[:, b, :]                          # (T, N), N on lanes
        e_b = lax.dot_general(
            hW[b:b + 1, :], outs_b,
            dimension_numbers=(((1,), (1,)), ((), ())),
            preferred_element_type=jnp.float32)                # (1, T)
        rows.append(e_b)
    energies = jnp.concatenate(rows, axis=0) + hb              # (B_TILE, T)

    # Numerically-stable softmax over T (lane axis); reciprocal on the EUP.
    m = jnp.max(energies, axis=-1, keepdims=True)
    e = jnp.exp(energies - m)
    denom = jnp.sum(e, axis=-1, keepdims=True)
    out_ref[...] = e * pl.reciprocal(denom, approx=True)       # (B_TILE, T)


def attn_forward(hidden, outputs, w, b, method="general"):
    """hidden: (B, N), outputs: (T, B, N)  ->  (B, 1, T) attention weights."""
    T, B, N = outputs.shape
    assert hidden.shape == (B, N)

    if method == "dot":
        # 'dot' is 'general' with identity projection and zero bias.
        w = jnp.eye(N, dtype=jnp.float32)
        b = jnp.zeros((N,), dtype=jnp.float32)
    elif method != "general":
        # TODO(synk): 'concat' scoring calls torch.cat(..., dim=1) on 1-D
        # tensors (broken in the reference module); not implemented.
        raise NotImplementedError(method)

    hidden = hidden.astype(jnp.float32)
    outputs = outputs.astype(jnp.float32)          # native (T, B, N); no transpose
    w = w.astype(jnp.float32)
    b2 = b.reshape(1, N).astype(jnp.float32)

    # Batch tile: multiple of 8 (sublane tile) when B allows, else full B.
    b_tile = 8 if B % 8 == 0 else B
    grid = (B // b_tile,)

    # VMEM budget: double-buffered blocks + resident weight, with headroom.
    # Capped at 48 MiB so it also fits v7x's 64 MiB physical VMEM.
    block_bytes = 4 * (T * b_tile * N + b_tile * N + N * N + N + b_tile * T)
    vmem_limit = int(min(max(2 * block_bytes + (4 << 20), 16 << 20), 48 << 20))

    # TODO(synk): for very long T on v7x, add a T grid axis + online-softmax
    # accumulator; current design keeps the full T extent in one block.
    grid_spec = pltpu.PrefetchScalarGridSpec(
        num_scalar_prefetch=0,
        grid=grid,
        in_specs=[
            pl.BlockSpec((b_tile, N), lambda i: (i, 0)),        # hidden tile
            pl.BlockSpec((T, b_tile, N), lambda i: (0, i, 0)),  # encoder outputs, native layout
            pl.BlockSpec((N, N), lambda i: (0, 0)),             # weight (resident)
            pl.BlockSpec((1, N), lambda i: (0, 0)),             # bias   (resident)
        ],
        out_specs=pl.BlockSpec((b_tile, T), lambda i: (i, 0)),  # lane-dense 2-D output
    )

    probs = pl.pallas_call(
        attn_general_kernel,
        out_shape=jax.ShapeDtypeStruct((B, T), jnp.float32),
        grid_spec=grid_spec,
        compiler_params=pltpu.CompilerParams(
            dimension_semantics=("parallel",),   # batch tiles are independent (2 TCs on v7x)
            vmem_limit_bytes=vmem_limit),
    )(hidden, outputs, w, b2)

    return probs[:, None, :]                     # (B, 1, T) — free reshape


def _reference(hidden, outputs, w, b):
    """Pure-JAX reference matching the PyTorch loop semantics."""
    proj = jnp.einsum("tbn,kn->tbk", outputs, w) + b                   # (T, B, N)
    energies = jnp.einsum("bk,tbk->bt", hidden, proj)                  # (B, T)
    return jax.nn.softmax(energies, axis=1)[:, None, :]                # (B, 1, T)


if __name__ == "__main__":
    def run_case(B, T, N):
        key = jax.random.PRNGKey(0)
        k_h, k_o, k_w, k_b = jax.random.split(key, 4)

        hidden = jax.random.normal(k_h, (B, N), dtype=jnp.float32)
        outputs = jax.random.normal(k_o, (T, B, N), dtype=jnp.float32)

        # nn.Linear(N, N) default init: U(-1/sqrt(N), 1/sqrt(N))
        bound = 1.0 / np.sqrt(N)
        w = jax.random.uniform(k_w, (N, N), minval=-bound, maxval=bound,
                               dtype=jnp.float32)
        b = jax.random.uniform(k_b, (N,), minval=-bound, maxval=bound,
                               dtype=jnp.float32)

        out = jax.block_until_ready(attn_forward(hidden, outputs, w, b,
                                                 method="general"))
        ref = _reference(hidden, outputs, w, b)
        # Tolerance loosened vs exact math because of pl.reciprocal(approx=True).
        np.testing.assert_allclose(np.asarray(out), np.asarray(ref),
                                   rtol=2e-3, atol=2e-3)
        assert out.shape == (B, 1, T)

    run_case(2, 8, 32)       # module-scale toy shapes (single block, grid=(1,))
    run_case(16, 128, 128)   # exercises the tiled B grid (b_tile=8, grid=(2,))

    print("KERNEL_OK")
</pallas_src>

<mosaic_0001>
module attributes {stable_mosaic.version = 11 : i64} {
  func.func @attn_general_kernel(%arg0: i32, %arg1: memref<2x32xf32, #tpu.memory_space<vmem>>, %arg2: memref<8x2x32xf32, #tpu.memory_space<vmem>>, %arg3: memref<32x32xf32, #tpu.memory_space<vmem>>, %arg4: memref<1x32xf32, #tpu.memory_space<vmem>>, %arg5: memref<2x8xf32, #tpu.memory_space<vmem>>) attributes {dimension_semantics = [#tpu.dimension_semantics<parallel>], iteration_bounds = array<i64: 1>, scalar_prefetch = 0 : i64, scratch_operands = 0 : i64, tpu.core_type = #tpu.core_type<tc>, window_params = [{transform_indices = @transform_0, window_bounds = array<i64: 2, 32>}, {transform_indices = @transform_1, window_bounds = array<i64: 8, 2, 32>}, {pipeline_mode = #tpu.pipeline_mode<synchronous>, transform_indices = @transform_2, window_bounds = array<i64: 32, 32>}, {pipeline_mode = #tpu.pipeline_mode<synchronous>, transform_indices = @transform_3, window_bounds = array<i64: 1, 32>}, {transform_indices = @transform_4, window_bounds = array<i64: 2, 8>}]} {
    %c0 = arith.constant 0 : index
    %c0_0 = arith.constant 0 : index
    %0 = vector.load %arg1[%c0, %c0_0] : memref<2x32xf32, #tpu.memory_space<vmem>>, vector<2x32xf32>
    %c0_1 = arith.constant 0 : index
    %c0_2 = arith.constant 0 : index
    %1 = vector.load %arg3[%c0_1, %c0_2] : memref<32x32xf32, #tpu.memory_space<vmem>>, vector<32x32xf32>
    %c0_3 = arith.constant 0 : index
    %c0_4 = arith.constant 0 : index
    %2 = vector.load %arg4[%c0_3, %c0_4] : memref<1x32xf32, #tpu.memory_space<vmem>>, vector<1x32xf32>
    %cst = arith.constant dense<0.000000e+00> : vector<2x32xf32>
    %3 = tpu.matmul %0, %1, %cst {dimension_numbers = #tpu.dot_dimension_numbers<[1], [0], [0], [1], [0, 0, 1, 1], [], []>} : vector<2x32xf32>, vector<32x32xf32>, vector<2x32xf32> -> vector<2x32xf32>
    %4 = vector.broadcast %2 : vector<1x32xf32> to vector<2x32xf32>
    %5 = arith.mulf %0, %4 : vector<2x32xf32>
    %cst_5 = arith.constant dense<0.000000e+00> : vector<2xf32>
    %6 = vector.multi_reduction <add>, %5, %cst_5 [1] : vector<2x32xf32> to vector<2xf32>
    %7 = vector.shape_cast %6 : vector<2xf32> to vector<2x1xf32>
    %c0_6 = arith.constant 0 : index
    %c0_7 = arith.constant 0 : index
    %c0_8 = arith.constant 0 : index
    %8 = vector.load %arg2[%c0_6, %c0_7, %c0_8] : memref<8x2x32xf32, #tpu.memory_space<vmem>>, vector<8x1x32xf32>
    %9 = vector.shape_cast %8 : vector<8x1x32xf32> to vector<8x32xf32>
    %10 = vector.extract_strided_slice %3 {offsets = [0, 0], sizes = [1, 32], strides = [1, 1]} : vector<2x32xf32> to vector<1x32xf32>
    %cst_9 = arith.constant dense<0.000000e+00> : vector<1x8xf32>
    %11 = tpu.matmul %10, %9, %cst_9 {dimension_numbers = #tpu.dot_dimension_numbers<[1], [1], [0], [0], [0, 0, 1, 0], [], []>} : vector<1x32xf32>, vector<8x32xf32>, vector<1x8xf32> -> vector<1x8xf32>
    %c0_10 = arith.constant 0 : index
    %c1 = arith.constant 1 : index
    %c0_11 = arith.constant 0 : index
    %12 = vector.load %arg2[%c0_10, %c1, %c0_11] : memref<8x2x32xf32, #tpu.memory_space<vmem>>, vector<8x1x32xf32>
    %13 = vector.shape_cast %12 : vector<8x1x32xf32> to vector<8x32xf32>
    %14 = vector.extract_strided_slice %3 {offsets = [1, 0], sizes = [1, 32], strides = [1, 1]} : vector<2x32xf32> to vector<1x32xf32>
    %cst_12 = arith.constant dense<0.000000e+00> : vector<1x8xf32>
    %15 = tpu.matmul %14, %13, %cst_12 {dimension_numbers = #tpu.dot_dimension_numbers<[1], [1], [0], [0], [0, 0, 1, 0], [], []>} : vector<1x32xf32>, vector<8x32xf32>, vector<1x8xf32> -> vector<1x8xf32>
    %16 = tpu.concatenate %11, %15 in 0 : vector<1x8xf32>, vector<1x8xf32> -> vector<2x8xf32>
    %17 = vector.broadcast %7 : vector<2x1xf32> to vector<2x8xf32>
    %18 = arith.addf %16, %17 : vector<2x8xf32>
    %cst_13 = arith.constant dense<0xFF800000> : vector<2xf32>
    %19 = vector.multi_reduction <maximumf>, %18, %cst_13 [1] : vector<2x8xf32> to vector<2xf32>
    %20 = vector.shape_cast %19 : vector<2xf32> to vector<2x1xf32>
    %21 = vector.broadcast %20 : vector<2x1xf32> to vector<2x8xf32>
    %22 = arith.subf %18, %21 : vector<2x8xf32>
    %23 = math.exp %22 : vector<2x8xf32>
    %cst_14 = arith.constant dense<0.000000e+00> : vector<2xf32>
    %24 = vector.multi_reduction <add>, %23, %cst_14 [1] : vector<2x8xf32> to vector<2xf32>
    %25 = vector.shape_cast %24 : vector<2xf32> to vector<2x1xf32>
    %26 = tpu.reciprocal %25 {approx = true} : vector<2x1xf32> -> vector<2x1xf32>
    %27 = vector.broadcast %26 : vector<2x1xf32> to vector<2x8xf32>
    %28 = arith.mulf %23, %27 : vector<2x8xf32>
    %c0_15 = arith.constant 0 : index
    %c0_16 = arith.constant 0 : index
    %29 = vector.load %arg5[%c0_15, %c0_16] : memref<2x8xf32, #tpu.memory_space<vmem>>, vector<2x8xf32>
    tpu.vector_store %arg5[%c0_15, %c0_16], %28 {strides = array<i32>} : memref<2x8xf32, #tpu.memory_space<vmem>>, vector<2x8xf32>,
    return
  }
  func.func @transform_0(%arg0: i32) -> (i32, i32) {
    %c0_i32 = arith.constant 0 : i32
    %c0_i32_0 = arith.constant 0 : i32
    return %arg0, %c0_i32 : i32, i32
  }
  func.func @transform_1(%arg0: i32) -> (i32, i32, i32) {
    %c0_i32 = arith.constant 0 : i32
    %c0_i32_0 = arith.constant 0 : i32
    %c0_i32_1 = arith.constant 0 : i32
    return %c0_i32, %arg0, %c0_i32_0 : i32, i32, i32
  }
  func.func @transform_2(%arg0: i32) -> (i32, i32) {
    %c0_i32 = arith.constant 0 : i32
    %c0_i32_0 = arith.constant 0 : i32
    %c0_i32_1 = arith.constant 0 : i32
    return %c0_i32, %c0_i32_0 : i32, i32
  }
  func.func @transform_3(%arg0: i32) -> (i32, i32) {
    %c0_i32 = arith.constant 0 : i32
    %c0_i32_0 = arith.constant 0 : i32
    %c0_i32_1 = arith.constant 0 : i32
    return %c0_i32, %c0_i32_0 : i32, i32
  }
  func.func @transform_4(%arg0: i32) -> (i32, i32) {
    %c0_i32 = arith.constant 0 : i32
    %c0_i32_0 = arith.constant 0 : i32
    return %arg0, %c0_i32 : i32, i32
  }
}

</mosaic_0001>

<llo_original>
// kernel: tpu_custom_call.1
$region0: #{tpu_custom_call.1}
  #allocation0 [shape = 'u32[]', space=smem, size = 0x4, offset = 0x4, fixed_abs, tag = 'smem constant byte address 0x4 - core index']
  #allocation1 [shape = 'u32[144,128]{1,0:T(1,128)}', space=vmem, size = 0x12000, scoped, tag = 'internal scratch']
  %s0 = inlined_call_operand.hbm [shape: f32[2,32], index: 0, kind: input, shape index: {}]
  %s1 = inlined_call_operand.hbm [shape: f32[8,2,32], index: 1, kind: input, shape index: {}]
  %s2 = inlined_call_operand.hbm [shape: f32[32,32], index: 2, kind: input, shape index: {}]
  %s3 = inlined_call_operand.vmem [shape: f32[1,32], index: 3, kind: input, shape index: {}]
  %s4 = inlined_call_operand.hbm [shape: f32[2,8], index: 4, kind: output, shape index: {}]
  %s5 = sld [smem:[#allocation0]]
  $region38: #{tpu_custom_call.1} parent=0
    _
  %s7 = ssub.s32 1, %s5
  %s8 = scalar_select 0, %s7, %s5
  $region1: #{tpu_custom_call.1} parent=0
    #allocation2 [shape = 'u8[1024]{0}', space=vmem, size = 0x400, scoped, tag = 'input window, operand 0, single buffered']
    #allocation3 [shape = 's32[1]{0}', space=sflag, size = 0x4, scoped, tag = 'scoped memory for tpu_custom_call.1']
    #allocation4 [shape = 's32[1]{0}', space=sflag, size = 0x4, scoped, tag = 'scoped memory for tpu_custom_call.1']
    #allocation5 [shape = 'u8[8192]{0}', space=vmem, size = 0x2000, scoped, tag = 'input window, operand 1, single buffered']
    #allocation6 [shape = 's32[1]{0}', space=sflag, size = 0x4, scoped, tag = 'scoped memory for tpu_custom_call.1']
    #allocation7 [shape = 'u8[16384]{0}', space=vmem, size = 0x4000, scoped, tag = 'input window, operand 2, single buffered']
    #allocation8 [shape = 'u8[1024]{0}', space=vmem, size = 0x400, scoped, tag = 'output window, operand 0, single buffered']
    %9 = vsyncpa [#allocation3], 0
    %10 = vsyncpa [#allocation6], 0
    %11 = vsyncpa [#allocation4], 0
    // Predicated region
    $region2: #{tpu_custom_call.1} parent=1 // pred_check
      _
    $region3: #{tpu_custom_call.1} parent=1 // pred_check_branch
      %13 = sbr.rel (0) target = $region5
    $region4: #{tpu_custom_call.1} parent=1 // pred_region
      %s15 = ssub.s32 32, 32
      %16 = vsyncadd [#allocation3], %s15
      %s18 = sshll.u32 [#allocation2], 4
      %s19 = int_to_ptr.vmem [resolvable:$true] %s18
      %21 = dma.hbm_to_vmem [thread:$0]  %s0, 32, %s19, [#allocation3]
    $region5: #{tpu_custom_call.1} parent=1 // pred_fallthru
      _
    // Predicated region
    $region6: #{tpu_custom_call.1} parent=1 // pred_check
      _
    $region7: #{tpu_custom_call.1} parent=1 // pred_check_branch
      %23 = sbr.rel (0) target = $region9
    $region8: #{tpu_custom_call.1} parent=1 // pred_region
      %s25 = ssub.s32 256, 256
      %26 = vsyncadd [#allocation6], %s25
      %s27 = sshll.u32 [#allocation5], 4
      %s28 = int_to_ptr.vmem [resolvable:$true] %s27
      %33 = dma.hbm_to_vmem [thread:$0]  %s1, 256, %s28, [#allocation6], 32, 32, 2
    $region9: #{tpu_custom_call.1} parent=1 // pred_fallthru
      _
    // Predicated region
    $region10: #{tpu_custom_call.1} parent=1 // pred_check
      _
    $region11: #{tpu_custom_call.1} parent=1 // pred_check_branch
      %35 = sbr.rel (0) target = $region13
    $region12: #{tpu_custom_call.1} parent=1 // pred_region
      %s37 = ssub.s32 512, 512
      %38 = vsyncadd [#allocation6], %s37
      %s39 = sshll.u32 [#allocation7], 4
      %s40 = int_to_ptr.vmem [resolvable:$true] %s39
      %45 = dma.hbm_to_vmem [thread:$0]  %s2, 512, %s40, [#allocation6], 128, 128, 8
    $region13: #{tpu_custom_call.1} parent=1 // pred_fallthru
      _
    // Predicated region
    $region14: #{tpu_custom_call.1} parent=1 // pred_check
      _
    $region15: #{tpu_custom_call.1} parent=1 // pred_check_branch
      %47 = sbr.rel (0) target = $region17
    $region16: #{tpu_custom_call.1} parent=1 // pred_region
      _
    $region17: #{tpu_custom_call.1} parent=1 // pred_fallthru
      _
    // Predicated region
    $region18: #{tpu_custom_call.1} parent=1 // pred_check
      _
    $region19: #{tpu_custom_call.1} parent=1 // pred_check_branch
      %49 = sbr.rel (0) target = $region21
    $region20: #{tpu_custom_call.1} parent=1 // pred_region
      %50 = dma.done [#allocation3], 32
    $region21: #{tpu_custom_call.1} parent=1 // pred_fallthru
      _
    // Predicated region
    $region22: #{tpu_custom_call.1} parent=1 // pred_check
      _
    $region23: #{tpu_custom_call.1} parent=1 // pred_check_branch
      %52 = sbr.rel (0) target = $region25
    $region24: #{tpu_custom_call.1} parent=1 // pred_region
      %53 = dma.done [#allocation6], 256
    $region25: #{tpu_custom_call.1} parent=1 // pred_fallthru
      _
    // Predicated region
    $region26: #{tpu_custom_call.1} parent=1 // pred_check
      _
    $region27: #{tpu_custom_call.1} parent=1 // pred_check_branch
      %55 = sbr.rel (0) target = $region29
    $region28: #{tpu_custom_call.1} parent=1 // pred_region
      %56 = dma.done [#allocation6], 512
    $region29: #{tpu_custom_call.1} parent=1 // pred_fallthru
      _
    %v57 = vld [vmem:[#allocation2] sm:$0x3]
    %v58 = vld [vmem:[#allocation7] sm:$0xff]
    %v59 = vld [vmem:[#allocation7 + $0x8] sm:$0xff]
    %v60 = vld [vmem:[#allocation7 + $0x10] sm:$0xff]
    %v61 = vld [vmem:[#allocation7 + $0x18] sm:$0xff]
    %v62 = vld [vmem:[%s3] sm:$0x1]
    %vm63 = vcmask 261120
    %v65 = vsel %vm63, %v57, 0
    %67 = vmatprep.subr.mxu0 0.0
    %68 = vmatpush1.msra.mxu0 %v58
    %69 = vmatprep.subr.mxu0 0.0
    %70 = vmatpush1.msra.mxu0 %v59
    %71 = vmatprep.subr.mxu0 0.0
    %72 = vmatpush1.msra.mxu0 %v60
    %73 = vmatprep.subr.mxu0 0.0
    %74 = vmatpush1.msra.mxu0 %v61
    %75 = vmatprep.subr.mxu0 0.0
    %76 = vmatpush1.msra.mxu0 0.0
    %77 = vmatprep.subr.mxu0 0.0
    %78 = vmatpush1.msra.mxu0 0.0
    %79 = vmatprep.subr.mxu0 0.0
    %80 = vmatpush1.msra.mxu0 0.0
    %81 = vmatprep.subr.mxu0 0.0
    %82 = vmatpush1.msra.mxu0 0.0
    %83 = vmatprep.subr.mxu0 0.0
    %84 = vmatpush1.msra.mxu0 0.0
    %85 = vmatprep.subr.mxu0 0.0
    %86 = vmatpush1.msra.mxu0 0.0
    %87 = vmatprep.subr.mxu0 0.0
    %88 = vmatpush1.msra.mxu0 0.0
    %89 = vmatprep.subr.mxu0 0.0
    %90 = vmatpush1.msra.mxu0 0.0
    %91 = vmatprep.subr.mxu0 0.0
    %92 = vmatpush1.msra.mxu0 0.0
    %93 = vmatprep.subr.mxu0 0.0
    %94 = vmatpush1.msra.mxu0 0.0
    %95 = vmatprep.subr.mxu0 0.0
    %96 = vmatpush1.msra.mxu0 0.0
    %97 = vmatprep.subr.mxu0 0.0
    %98 = vmatpush1.msra.mxu0 0.0
    %99 = vmatprep.subr.mxu0 0.0
    %100 = vmatpush1.msra.mxu0 0.0
    %101 = vmatprep.subr.mxu0 0.0
    %102 = vmatpush1.msra.mxu0 0.0
    %103 = vmatprep.subr.mxu0 0.0
    %104 = vmatpush1.msra.mxu0 0.0
    %105 = vmatprep.subr.mxu0 0.0
    %106 = vmatpush1.msra.mxu0 0.0
    %107 = vmatprep.subr.mxu0 0.0
    %108 = vmatpush1.msra.mxu0 0.0
    %109 = vmatprep.subr.mxu0 0.0
    %110 = vmatpush1.msra.mxu0 0.0
    %111 = vmatprep.subr.mxu0 0.0
    %112 = vmatpush1.msra.mxu0 0.0
    %113 = vmatprep.subr.mxu0 0.0
    %114 = vmatpush1.msra.mxu0 0.0
    %115 = vmatprep.subr.mxu0 0.0
    %116 = vmatpush1.msra.mxu0 0.0
    %117 = vmatprep.subr.mxu0 0.0
    %118 = vmatpush1.msra.mxu0 0.0
    %119 = vmatprep.subr.mxu0 0.0
    %120 = vmatpush1.msra.mxu0 0.0
    %121 = vmatprep.subr.mxu0 0.0
    %122 = vmatpush1.msra.mxu0 0.0
    %123 = vmatprep.subr.mxu0 0.0
    %124 = vmatpush1.msra.mxu0 0.0
    %125 = vmatprep.subr.mxu0 0.0
    %126 = vmatpush1.msra.mxu0 0.0
    %127 = vmatprep.subr.mxu0 0.0
    %128 = vmatpush1.msra.mxu0 0.0
    %129 = vmatprep.subr.mxu0 0.0
    %130 = vmatpush1.msra.mxu0 0.0
    %131 = vmatprep.mubr.f32.mxu0 0.0
    %132 = vmatmul.mubr.f32.gmra.mrb[0].mxu0 %v65
    %v133 = vpop.f32.mrb[0].mxu0
    %v134 = vadd.f32 0.0, %v133
    %v135 = vpop.f32.mrb[0].mxu0
    %136 = vdwg.mxu0
    %v138 = vlaneseq
    %v139 = vshrl.u32 %v138, 7
    %v140 = vsub.s32 0, %v139
    %v141 = vrot.slane %v62, %v140
    %v143 = vmul.f32 %v57, %v141
    %vm144 = vcmask 254976
    %v145 = vsel %vm144, %v143, 0.0
    %146 = vadd.xlane.f32.xlu0 %v145
    %v147 = vpop.xlane.xlu0 %146
    %v148 = vld [vmem:[#allocation5] sm:$0x1]
    %v149 = vld [vmem:[#allocation5 + $0x2] sm:$0x1]
    %v150 = vld [vmem:[#allocation5 + $0x4] sm:$0x1]
    %v151 = vld [vmem:[#allocation5 + $0x6] sm:$0x1]
    %v152 = vld [vmem:[#allocation5 + $0x8] sm:$0x1]
    %v153 = vld [vmem:[#allocation5 + $0xa] sm:$0x1]
    %v154 = vld [vmem:[#allocation5 + $0xc] sm:$0x1]
    %v155 = vld [vmem:[#allocation5 + $0xe] sm:$0x1]
    %v164 = vrot.slane %v149, 7
    %vm165 = vcmask 1041409
    %v166 = vsel %vm165, %v164, %v148
    %v167 = vrot.slane %v150, 6
    %vm168 = vcmask 1042434
    %v169 = vsel %vm168, %v167, %v166
    %v170 = vrot.slane %v151, 5
    %vm171 = vcmask 1043459
    %v172 = vsel %vm171, %v170, %v169
    %v173 = vrot.slane %v152, 4
    %vm174 = vcmask 1044484
    %v175 = vsel %vm174, %v173, %v172
    %v176 = vrot.slane %v153, 3
    %vm177 = vcmask 1045509
    %v178 = vsel %vm177, %v176, %v175
    %v179 = vrot.slane %v154, 2
    %vm180 = vcmask 1046534
    %v181 = vsel %vm180, %v179, %v178
    %v182 = vrot.slane %v155, 1
    %vm183 = vcmask 1047559
    %v184 = vsel %vm183, %v182, %v181
    %v186 = vsel %vm63, %v134, 0
    %v188 = vsel %vm63, %v184, 0
    %190 = vmatprep.subr.mxu0 0.0
    %191 = vmatpush1.xpose.msra.mxu0 %v188
    %192 = vmatprep.subr.mxu0 0.0
    %193 = vmatpush1.xpose.msra.mxu0 0.0
    %194 = vmatprep.subr.mxu0 0.0
    %195 = vmatpush1.xpose.msra.mxu0 0.0
    %196 = vmatprep.subr.mxu0 0.0
    %197 = vmatpush1.xpose.msra.mxu0 0.0
    %198 = vmatprep.subr.mxu0 0.0
    %199 = vmatpush1.xpose.msra.mxu0 0.0
    %200 = vmatprep.subr.mxu0 0.0
    %201 = vmatpush1.xpose.msra.mxu0 0.0
    %202 = vmatprep.subr.mxu0 0.0
    %203 = vmatpush1.xpose.msra.mxu0 0.0
    %204 = vmatprep.subr.mxu0 0.0
    %205 = vmatpush1.xpose.msra.mxu0 0.0
    %206 = vmatprep.subr.mxu0 0.0
    %207 = vmatpush1.xpose.msra.mxu0 0.0
    %208 = vmatprep.subr.mxu0 0.0
    %209 = vmatpush1.xpose.msra.mxu0 0.0
    %210 = vmatprep.subr.mxu0 0.0
    %211 = vmatpush1.xpose.msra.mxu0 0.0
    %212 = vmatprep.subr.mxu0 0.0
    %213 = vmatpush1.xpose.msra.mxu0 0.0
    %214 = vmatprep.subr.mxu0 0.0
    %215 = vmatpush1.xpose.msra.mxu0 0.0
    %216 = vmatprep.subr.mxu0 0.0
    %217 = vmatpush1.xpose.msra.mxu0 0.0
    %218 = vmatprep.subr.mxu0 0.0
    %219 = vmatpush1.xpose.msra.mxu0 0.0
    %220 = vmatprep.subr.mxu0 0.0
    %221 = vmatpush1.xpose.msra.mxu0 0.0
    %222 = vmatprep.subr.mxu0 0.0
    %223 = vmatpush1.xpose.msra.mxu0 0.0
    %224 = vmatprep.subr.mxu0 0.0
    %225 = vmatpush1.xpose.msra.mxu0 0.0
    %226 = vmatprep.subr.mxu0 0.0
    %227 = vmatpush1.xpose.msra.mxu0 0.0
    %228 = vmatprep.subr.mxu0 0.0
    %229 = vmatpush1.xpose.msra.mxu0 0.0
    %230 = vmatprep.subr.mxu0 0.0
    %231 = vmatpush1.xpose.msra.mxu0 0.0
    %232 = vmatprep.subr.mxu0 0.0
    %233 = vmatpush1.xpose.msra.mxu0 0.0
    %234 = vmatprep.subr.mxu0 0.0
    %235 = vmatpush1.xpose.msra.mxu0 0.0
    %236 = vmatprep.subr.mxu0 0.0
    %237 = vmatpush1.xpose.msra.mxu0 0.0
    %238 = vmatprep.subr.mxu0 0.0
    %239 = vmatpush1.xpose.msra.mxu0 0.0
    %240 = vmatprep.subr.mxu0 0.0
    %241 = vmatpush1.xpose.msra.mxu0 0.0
    %242 = vmatprep.subr.mxu0 0.0
    %243 = vmatpush1.xpose.msra.mxu0 0.0
    %244 = vmatprep.subr.mxu0 0.0
    %245 = vmatpush1.xpose.msra.mxu0 0.0
    %246 = vmatprep.subr.mxu0 0.0
    %247 = vmatpush1.xpose.msra.mxu0 0.0
    %248 = vmatprep.subr.mxu0 0.0
    %249 = vmatpush1.xpose.msra.mxu0 0.0
    %250 = vmatprep.subr.mxu0 0.0
    %251 = vmatpush1.xpose.msra.mxu0 0.0
    %252 = vmatprep.subr.mxu0 0.0
    %253 = vmatpush1.xpose.msra.mxu0 0.0
    %254 = vmatprep.mubr.f32.mxu0 0.0
    %255 = vmatmul.mubr.f32.gmra.mrb[0].mxu0 %v186
    %v256 = vpop.f32.mrb[0].mxu0
    %v257 = vadd.f32 0.0, %v256
    %v258 = vpop.f32.mrb[0].mxu0
    %259 = vdwg.mxu0
    %v260 = vld [vmem:[#allocation5 + $0x1] sm:$0x1]
    %v261 = vld [vmem:[#allocation5 + $0x3] sm:$0x1]
    %v262 = vld [vmem:[#allocation5 + $0x5] sm:$0x1]
    %v263 = vld [vmem:[#allocation5 + $0x7] sm:$0x1]
    %v264 = vld [vmem:[#allocation5 + $0x9] sm:$0x1]
    %v265 = vld [vmem:[#allocation5 + $0xb] sm:$0x1]
    %v266 = vld [vmem:[#allocation5 + $0xd] sm:$0x1]
    %v267 = vld [vmem:[#allocation5 + $0xf] sm:$0x1]
    %v268 = vrot.slane %v134, 1
    %v277 = vrot.slane %v261, 7
    %v278 = vsel %vm165, %v277, %v260
    %v279 = vrot.slane %v262, 6
    %v280 = vsel %vm168, %v279, %v278
    %v281 = vrot.slane %v263, 5
    %v282 = vsel %vm171, %v281, %v280
    %v283 = vrot.slane %v264, 4
    %v284 = vsel %vm174, %v283, %v282
    %v285 = vrot.slane %v265, 3
    %v286 = vsel %vm177, %v285, %v284
    %v287 = vrot.slane %v266, 2
    %v288 = vsel %vm180, %v287, %v286
    %v289 = vrot.slane %v267, 1
    %v290 = vsel %vm183, %v289, %v288
    %v291 = vsel %vm63, %v268, 0
    %v293 = vsel %vm63, %v290, 0
    %295 = vmatprep.subr.mxu0 0.0
    %296 = vmatpush1.xpose.msra.mxu0 %v293
    %297 = vmatprep.subr.mxu0 0.0
    %298 = vmatpush1.xpose.msra.mxu0 0.0
    %299 = vmatprep.subr.mxu0 0.0
    %300 = vmatpush1.xpose.msra.mxu0 0.0
    %301 = vmatprep.subr.mxu0 0.0
    %302 = vmatpush1.xpose.msra.mxu0 0.0
    %303 = vmatprep.subr.mxu0 0.0
    %304 = vmatpush1.xpose.msra.mxu0 0.0
    %305 = vmatprep.subr.mxu0 0.0
    %306 = vmatpush1.xpose.msra.mxu0 0.0
    %307 = vmatprep.subr.mxu0 0.0
    %308 = vmatpush1.xpose.msra.mxu0 0.0
    %309 = vmatprep.subr.mxu0 0.0
    %310 = vmatpush1.xpose.msra.mxu0 0.0
    %311 = vmatprep.subr.mxu0 0.0
    %312 = vmatpush1.xpose.msra.mxu0 0.0
    %313 = vmatprep.subr.mxu0 0.0
    %314 = vmatpush1.xpose.msra.mxu0 0.0
    %315 = vmatprep.subr.mxu0 0.0
    %316 = vmatpush1.xpose.msra.mxu0 0.0
    %317 = vmatprep.subr.mxu0 0.0
    %318 = vmatpush1.xpose.msra.mxu0 0.0
    %319 = vmatprep.subr.mxu0 0.0
    %320 = vmatpush1.xpose.msra.mxu0 0.0
    %321 = vmatprep.subr.mxu0 0.0
    %322 = vmatpush1.xpose.msra.mxu0 0.0
    %323 = vmatprep.subr.mxu0 0.0
    %324 = vmatpush1.xpose.msra.mxu0 0.0
    %325 = vmatprep.subr.mxu0 0.0
    %326 = vmatpush1.xpose.msra.mxu0 0.0
    %327 = vmatprep.subr.mxu0 0.0
    %328 = vmatpush1.xpose.msra.mxu0 0.0
    %329 = vmatprep.subr.mxu0 0.0
    %330 = vmatpush1.xpose.msra.mxu0 0.0
    %331 = vmatprep.subr.mxu0 0.0
    %332 = vmatpush1.xpose.msra.mxu0 0.0
    %333 = vmatprep.subr.mxu0 0.0
    %334 = vmatpush1.xpose.msra.mxu0 0.0
    %335 = vmatprep.subr.mxu0 0.0
    %336 = vmatpush1.xpose.msra.mxu0 0.0
    %337 = vmatprep.subr.mxu0 0.0
    %338 = vmatpush1.xpose.msra.mxu0 0.0
    %339 = vmatprep.subr.mxu0 0.0
    %340 = vmatpush1.xpose.msra.mxu0 0.0
    %341 = vmatprep.subr.mxu0 0.0
    %342 = vmatpush1.xpose.msra.mxu0 0.0
    %343 = vmatprep.subr.mxu0 0.0
    %344 = vmatpush1.xpose.msra.mxu0 0.0
    %345 = vmatprep.subr.mxu0 0.0
    %346 = vmatpush1.xpose.msra.mxu0 0.0
    %347 = vmatprep.subr.mxu0 0.0
    %348 = vmatpush1.xpose.msra.mxu0 0.0
    %349 = vmatprep.subr.mxu0 0.0
    %350 = vmatpush1.xpose.msra.mxu0 0.0
    %351 = vmatprep.subr.mxu0 0.0
    %352 = vmatpush1.xpose.msra.mxu0 0.0
    %353 = vmatprep.subr.mxu0 0.0
    %354 = vmatpush1.xpose.msra.mxu0 0.0
    %355 = vmatprep.subr.mxu0 0.0
    %356 = vmatpush1.xpose.msra.mxu0 0.0
    %357 = vmatprep.subr.mxu0 0.0
    %358 = vmatpush1.xpose.msra.mxu0 0.0
    %359 = vmatprep.mubr.f32.mxu0 0.0
    %360 = vmatmul.mubr.f32.gmra.mrb[0].mxu0 %v291
    %v361 = vpop.f32.mrb[0].mxu0
    %v362 = vadd.f32 0.0, %v361
    %v363 = vpop.f32.mrb[0].mxu0
    %364 = vdwg.mxu0
    %v366 = vrot.slane %v362, 7
    %vm368 = vcmask 1040384
    %v369 = vsel %vm368, %v257, %v366
    %v370 = vadd.f32 %v369, %v147
    %vm371 = vcmask 58368
    %v372 = vsel %vm371, %v370, -inf
    %373 = vmax.xlane.f32.xlu0 %v372
    %v374 = vpop.xlane.xlu0 %373
    %v375 = vsub.f32 %v370, %v374
    %v376 = vmul.f32 %v375, 1.442695
    %v377 = vpow.pop %v376
    %v378 = vsel %vm371, %v377, 0.0
    %379 = vadd.xlane.f32.xlu0 %v378
    %v380 = vpop.xlane.xlu0 %379
    %v381 = vrcp.pop %v380
    %v382 = vmul.f32 %v377, %v381
    %383 = vst.msk [vmem:[#allocation8] sm:$0x3] %vm371, %v382
    // Predicated region
    $region30: #{tpu_custom_call.1} parent=1 // pred_check
      _
    $region31: #{tpu_custom_call.1} parent=1 // pred_check_branch
      %385 = sbr.rel (0) target = $region33
    $region32: #{tpu_custom_call.1} parent=1 // pred_region
      %s387 = ssub.s32 32, 32
      %388 = vsyncadd [#allocation4], %s387
      %s390 = sshll.u32 [#allocation8], 4
      %s391 = int_to_ptr.vmem [resolvable:$true] %s390
      %393 = dma.vmem_to_hbm [thread:$0]  %s391, 32, %s4, [#allocation4]
    $region33: #{tpu_custom_call.1} parent=1 // pred_fallthru
      _
    // Predicated region
    $region34: #{tpu_custom_call.1} parent=1 // pred_check
      _
    $region35: #{tpu_custom_call.1} parent=1 // pred_check_branch
      %395 = sbr.rel (0) target = $region37
    $region36: #{tpu_custom_call.1} parent=1 // pred_region
      %396 = dma.done [#allocation4], 32
    $region37: #{tpu_custom_call.1} parent=1 // pred_fallthru
      _
    %397 = vsyncpa [#allocation3], 1
    %398 = vsyncpa [#allocation6], 1
    %399 = vsyncpa [#allocation4], 1

</llo_original>
